<compile_context>
chip_gen: v7x
topology: tpu7x:2x2x1
jax: 0.10.0
libtpu: 0.0.40
codegen_flags: <defaults>
</compile_context>

<pallas_src>
import functools

import jax
import jax.numpy as jnp
from jax import lax
from jax.experimental import pallas as pl
from jax.experimental.pallas import tpu as pltpu


def _round_up(x, m):
    return (x + m - 1) // m * m


# -----------------------------------------------------------------------------
# Fused kernel: depthwise-3x3 + pointwise-1x1 + bias as ONE MXU contraction.
# One grid step per batch element; all operands resident in VMEM.
# -----------------------------------------------------------------------------
def _sepconv_kernel(x_ref, m_ref, w_ref, b_ref, o_ref, *, W, HW):
    # x_ref: (1, Cin, HW)     NCHW image, spatial flattened onto lanes
    # m_ref: (9, HW)          per-tap validity masks (halo / pad=1 handling)
    # w_ref: (Coutp, 9*Cin)   folded weights: w[o, t*Cin + c] = pw[o,c]*dw[c,t]
    # b_ref: (Coutp, 1)       bias column (zero in padded rows)
    # o_ref: (1, Coutp, HW)   lane-dense output block (free reshape to NCHW)
    x2d = x_ref[0]                                   # (Cin, HW), f32

    # im2col-lite: 9 shifted+masked copies stacked along the K (sublane) axis.
    taps = []
    t = 0
    for dy in (-1, 0, 1):
        for dx in (-1, 0, 1):
            d = dy * W + dx                          # flattened spatial offset
            if d == 0:
                taps.append(x2d)                     # center tap: no shift/mask
            else:
                s = (-d) % HW                        # result[p] = x2d[(p+d) % HW]
                shifted = pltpu.roll(x2d, s, axis=1)           # XLU lane rotate
                taps.append(shifted * m_ref[t:t + 1, :])       # zero halo/wraps
            t += 1
    lhs_t = jnp.concatenate(taps, axis=0)            # (9*Cin, HW)

    # Single MXU matmul: (Coutp, 9*Cin) @ (9*Cin, HW) -> (Coutp, HW), f32 acc.
    out = jnp.dot(w_ref[...], lhs_t, preferred_element_type=jnp.float32)
    out = out + b_ref[...]                           # (Coutp, 1) lane-broadcast
    o_ref[0] = out.astype(o_ref.dtype)               # lane-dense store


# -----------------------------------------------------------------------------
# Wrapper: PyTorch layouts in/out (NCHW) via FREE reshapes only.
# -----------------------------------------------------------------------------
@jax.jit
def separable_conv2d(x_nchw, dw, pw, b):
    """SeparableConv2d forward.

    x_nchw: (B, Cin, H, W) f32
    dw:     (Cin, 3, 3)    depthwise weight (PyTorch (Cin,1,3,3) squeezed)
    pw:     (Cout, Cin)    pointwise weight (PyTorch (Cout,Cin,1,1) squeezed)
    b:      (Cout,)        pointwise bias
    returns (B, Cout, H, W) f32
    """
    B, Cin, H, W = x_nchw.shape
    Cout = pw.shape[0]
    HW = H * W
    Coutp = _round_up(Cout, 128)     # lane-dense output channels (128-multiple)

    # Input: metadata-only reshape NCHW -> (B, Cin, H*W). No transpose, no pad.
    x_flat = x_nchw.astype(jnp.float32).reshape(B, Cin, HW)

    # Fold depthwise into pointwise: w2t[o, t*Cin + c] = pw[o, c] * dw[c, ky, kx]
    # with t = ky*3 + kx (same (dy outer, dx inner) order as the kernel loop).
    dw_f = dw.astype(jnp.float32)
    pw_f = pw.astype(jnp.float32)
    dw_t = jnp.transpose(dw_f, (1, 2, 0)).reshape(9, Cin)            # [t, c]
    w2 = dw_t[:, :, None] * jnp.transpose(pw_f, (1, 0))[None]        # (9,Cin,Cout)
    w2t = jnp.transpose(w2.reshape(9 * Cin, Cout), (1, 0))           # (Cout,9Cin)
    w2t = jnp.pad(w2t, ((0, Coutp - Cout), (0, 0)))                  # (Coutp,9Cin)
    b_k = jnp.pad(b.astype(jnp.float32), (0, Coutp - Cout)).reshape(Coutp, 1)

    # Per-tap validity masks over the flattened spatial axis (replaces the
    # wrapper-side jnp.pad halo; also zeros the circular-roll wrap positions).
    hh = jnp.arange(H)[:, None]
    ww = jnp.arange(W)[None, :]
    rows = []
    for dy in (-1, 0, 1):
        for dx in (-1, 0, 1):
            valid = ((hh + dy >= 0) & (hh + dy < H) &
                     (ww + dx >= 0) & (ww + dx < W))
            rows.append(valid.reshape(HW))
    mask = jnp.stack(rows, axis=0).astype(jnp.float32)               # (9, HW)

    flops = 2 * B * Coutp * HW * (9 * Cin) + B * 9 * Cin * HW
    bytes_accessed = 4 * int(x_flat.size + mask.size + w2t.size + b_k.size
                             + B * Coutp * HW)

    kernel = functools.partial(_sepconv_kernel, W=W, HW=HW)
    out = pl.pallas_call(
        kernel,
        out_shape=jax.ShapeDtypeStruct((B, Coutp, HW), jnp.float32),
        grid=(B,),
        in_specs=[
            pl.BlockSpec((1, Cin, HW), lambda n: (n, 0, 0)),
            pl.BlockSpec((9, HW), lambda n: (0, 0)),
            pl.BlockSpec((Coutp, 9 * Cin), lambda n: (0, 0)),
            pl.BlockSpec((Coutp, 1), lambda n: (0, 0)),
        ],
        out_specs=pl.BlockSpec((1, Coutp, HW), lambda n: (n, 0, 0)),
        compiler_params=pltpu.CompilerParams(
            dimension_semantics=("parallel",)),      # v7x: 2 TCs split the batch
        cost_estimate=pl.CostEstimate(
            flops=flops, transcendentals=0, bytes_accessed=bytes_accessed),
    )(x_flat, mask, w2t, b_k)

    # Drop channel padding (no-op when Cout % 128 == 0) and a FREE reshape
    # back to NCHW — no output transpose pass.
    return out[:, :Cout, :].reshape(B, Cout, H, W)


# -----------------------------------------------------------------------------
# Pure-JAX reference (grouped conv + 1x1) for the correctness check.
# -----------------------------------------------------------------------------
def _ref_forward(x_nchw, dw, pw, b):
    B, Cin, H, W = x_nchw.shape
    x = jnp.transpose(x_nchw, (0, 2, 3, 1)).astype(jnp.float32)
    dw_hwio = jnp.transpose(dw, (1, 2, 0))[:, :, None, :]            # (3,3,1,Cin)
    y = lax.conv_general_dilated(
        x, dw_hwio, (1, 1), "SAME",
        dimension_numbers=("NHWC", "HWIO", "NHWC"),
        feature_group_count=Cin,
        precision=lax.Precision.HIGHEST)
    out = jnp.einsum("bhwc,oc->bhwo", y, pw,
                     precision=lax.Precision.HIGHEST) + b[None, None, None, :]
    return jnp.transpose(out, (0, 3, 1, 2))


if __name__ == "__main__":
    # Small, realistic separable-conv config: in=32, out=128, 16x16 spatial.
    B, Cin, H, W = 2, 32, 16, 16
    Cout = 128

    key = jax.random.PRNGKey(0)
    kx, kdw, kpw, kb = jax.random.split(key, 4)
    x = jax.random.normal(kx, (B, Cin, H, W), jnp.float32)            # NCHW
    dw = jax.random.normal(kdw, (Cin, 3, 3), jnp.float32) * (2.0 / 9.0) ** 0.5
    pw = jax.random.normal(kpw, (Cout, Cin), jnp.float32) * (2.0 / Cin) ** 0.5
    b = jax.random.normal(kb, (Cout,), jnp.float32) * 0.1

    out = jax.block_until_ready(separable_conv2d(x, dw, pw, b))
    ref = _ref_forward(x, dw, pw, b)

    assert out.shape == (B, Cout, H, W), out.shape
    max_err = float(jnp.max(jnp.abs(out - ref)))
    # Tolerance sized generously for MXU f32 multi-pass rounding (typical error
    # is ~1e-5); any structural bug (wrong tap/shift/mask/weight) gives O(1)
    # errors and trips this by >10x.
    assert max_err < 5e-2, f"max_err={max_err}"
    print("KERNEL_OK")
</pallas_src>

<mosaic_0001>
module attributes {stable_mosaic.version = 11 : i64} {
  func.func @_sepconv_kernel(%arg0: i32, %arg1: memref<1x32x256xf32, #tpu.memory_space<vmem>>, %arg2: memref<9x256xf32, #tpu.memory_space<vmem>>, %arg3: memref<128x288xf32, #tpu.memory_space<vmem>>, %arg4: memref<128x1xf32, #tpu.memory_space<vmem>>, %arg5: memref<1x128x256xf32, #tpu.memory_space<vmem>>) attributes {dimension_semantics = [#tpu.dimension_semantics<parallel>], iteration_bounds = array<i64: 2>, scalar_prefetch = 0 : i64, scratch_operands = 0 : i64, tpu.core_type = #tpu.core_type<tc>, window_params = [{transform_indices = @transform_0, window_bounds = array<i64: 1, 32, 256>}, {pipeline_mode = #tpu.pipeline_mode<synchronous>, transform_indices = @transform_1, window_bounds = array<i64: 9, 256>}, {pipeline_mode = #tpu.pipeline_mode<synchronous>, transform_indices = @transform_2, window_bounds = array<i64: 128, 288>}, {pipeline_mode = #tpu.pipeline_mode<synchronous>, transform_indices = @transform_3, window_bounds = array<i64: 128, 1>}, {transform_indices = @transform_4, window_bounds = array<i64: 1, 128, 256>}]} {
    %c0 = arith.constant 0 : index
    %c0_0 = arith.constant 0 : index
    %c0_1 = arith.constant 0 : index
    %0 = vector.load %arg1[%c0, %c0_0, %c0_1] : memref<1x32x256xf32, #tpu.memory_space<vmem>>, vector<1x32x256xf32>
    %1 = vector.shape_cast %0 : vector<1x32x256xf32> to vector<32x256xf32>
    %c17_i32 = arith.constant 17 : i32
    %2 = tpu.dynamic_rotate %1 by %c17_i32 dim 1 : vector<32x256xf32>, i32 -> vector<32x256xf32>
    %c0_2 = arith.constant 0 : index
    %c0_3 = arith.constant 0 : index
    %3 = vector.load %arg2[%c0_2, %c0_3] : memref<9x256xf32, #tpu.memory_space<vmem>>, vector<1x256xf32>
    %4 = vector.broadcast %3 : vector<1x256xf32> to vector<32x256xf32>
    %5 = arith.mulf %2, %4 : vector<32x256xf32>
    %c16_i32 = arith.constant 16 : i32
    %6 = tpu.dynamic_rotate %1 by %c16_i32 dim 1 : vector<32x256xf32>, i32 -> vector<32x256xf32>
    %c1 = arith.constant 1 : index
    %c0_4 = arith.constant 0 : index
    %7 = vector.load %arg2[%c1, %c0_4] : memref<9x256xf32, #tpu.memory_space<vmem>>, vector<1x256xf32>
    %8 = vector.broadcast %7 : vector<1x256xf32> to vector<32x256xf32>
    %9 = arith.mulf %6, %8 : vector<32x256xf32>
    %c15_i32 = arith.constant 15 : i32
    %10 = tpu.dynamic_rotate %1 by %c15_i32 dim 1 : vector<32x256xf32>, i32 -> vector<32x256xf32>
    %c2 = arith.constant 2 : index
    %c0_5 = arith.constant 0 : index
    %11 = vector.load %arg2[%c2, %c0_5] : memref<9x256xf32, #tpu.memory_space<vmem>>, vector<1x256xf32>
    %12 = vector.broadcast %11 : vector<1x256xf32> to vector<32x256xf32>
    %13 = arith.mulf %10, %12 : vector<32x256xf32>
    %c1_i32 = arith.constant 1 : i32
    %14 = tpu.dynamic_rotate %1 by %c1_i32 dim 1 : vector<32x256xf32>, i32 -> vector<32x256xf32>
    %c3 = arith.constant 3 : index
    %c0_6 = arith.constant 0 : index
    %15 = vector.load %arg2[%c3, %c0_6] : memref<9x256xf32, #tpu.memory_space<vmem>>, vector<1x256xf32>
    %16 = vector.broadcast %15 : vector<1x256xf32> to vector<32x256xf32>
    %17 = arith.mulf %14, %16 : vector<32x256xf32>
    %c255_i32 = arith.constant 255 : i32
    %18 = tpu.dynamic_rotate %1 by %c255_i32 dim 1 : vector<32x256xf32>, i32 -> vector<32x256xf32>
    %c5 = arith.constant 5 : index
    %c0_7 = arith.constant 0 : index
    %19 = vector.load %arg2[%c5, %c0_7] : memref<9x256xf32, #tpu.memory_space<vmem>>, vector<1x256xf32>
    %20 = vector.broadcast %19 : vector<1x256xf32> to vector<32x256xf32>
    %21 = arith.mulf %18, %20 : vector<32x256xf32>
    %c241_i32 = arith.constant 241 : i32
    %22 = tpu.dynamic_rotate %1 by %c241_i32 dim 1 : vector<32x256xf32>, i32 -> vector<32x256xf32>
    %c6 = arith.constant 6 : index
    %c0_8 = arith.constant 0 : index
    %23 = vector.load %arg2[%c6, %c0_8] : memref<9x256xf32, #tpu.memory_space<vmem>>, vector<1x256xf32>
    %24 = vector.broadcast %23 : vector<1x256xf32> to vector<32x256xf32>
    %25 = arith.mulf %22, %24 : vector<32x256xf32>
    %c240_i32 = arith.constant 240 : i32
    %26 = tpu.dynamic_rotate %1 by %c240_i32 dim 1 : vector<32x256xf32>, i32 -> vector<32x256xf32>
    %c7 = arith.constant 7 : index
    %c0_9 = arith.constant 0 : index
    %27 = vector.load %arg2[%c7, %c0_9] : memref<9x256xf32, #tpu.memory_space<vmem>>, vector<1x256xf32>
    %28 = vector.broadcast %27 : vector<1x256xf32> to vector<32x256xf32>
    %29 = arith.mulf %26, %28 : vector<32x256xf32>
    %c239_i32 = arith.constant 239 : i32
    %30 = tpu.dynamic_rotate %1 by %c239_i32 dim 1 : vector<32x256xf32>, i32 -> vector<32x256xf32>
    %c8 = arith.constant 8 : index
    %c0_10 = arith.constant 0 : index
    %31 = vector.load %arg2[%c8, %c0_10] : memref<9x256xf32, #tpu.memory_space<vmem>>, vector<1x256xf32>
    %32 = vector.broadcast %31 : vector<1x256xf32> to vector<32x256xf32>
    %33 = arith.mulf %30, %32 : vector<32x256xf32>
    %34 = tpu.concatenate %5, %9, %13, %17, %1, %21, %25, %29, %33 in 0 : vector<32x256xf32>, vector<32x256xf32>, vector<32x256xf32>, vector<32x256xf32>, vector<32x256xf32>, vector<32x256xf32>, vector<32x256xf32>, vector<32x256xf32>, vector<32x256xf32> -> vector<288x256xf32>
    %c0_11 = arith.constant 0 : index
    %c0_12 = arith.constant 0 : index
    %35 = vector.load %arg3[%c0_11, %c0_12] : memref<128x288xf32, #tpu.memory_space<vmem>>, vector<128x288xf32>
    %cst = arith.constant dense<0.000000e+00> : vector<128x256xf32>
    %36 = tpu.matmul %35, %34, %cst {dimension_numbers = #tpu.dot_dimension_numbers<[1], [0], [0], [1], [0, 0, 1, 1], [], []>} : vector<128x288xf32>, vector<288x256xf32>, vector<128x256xf32> -> vector<128x256xf32>
    %c0_13 = arith.constant 0 : index
    %c0_14 = arith.constant 0 : index
    %37 = vector.load %arg4[%c0_13, %c0_14] : memref<128x1xf32, #tpu.memory_space<vmem>>, vector<128x1xf32>
    %38 = vector.broadcast %37 : vector<128x1xf32> to vector<128x256xf32>
    %39 = arith.addf %36, %38 : vector<128x256xf32>
    %c0_15 = arith.constant 0 : index
    %c0_16 = arith.constant 0 : index
    %c0_17 = arith.constant 0 : index
    %40 = vector.load %arg5[%c0_15, %c0_16, %c0_17] : memref<1x128x256xf32, #tpu.memory_space<vmem>>, vector<1x128x256xf32>
    %41 = vector.shape_cast %40 : vector<1x128x256xf32> to vector<128x256xf32>
    %42 = vector.shape_cast %39 : vector<128x256xf32> to vector<1x128x256xf32>
    tpu.vector_store %arg5[%c0_15, %c0_16, %c0_17], %42 {strides = array<i32>} : memref<1x128x256xf32, #tpu.memory_space<vmem>>, vector<1x128x256xf32>,
    return
  }
  func.func @transform_0(%arg0: i32) -> (i32, i32, i32) {
    %c0_i32 = arith.constant 0 : i32
    %c0_i32_0 = arith.constant 0 : i32
    %c0_i32_1 = arith.constant 0 : i32
    return %arg0, %c0_i32, %c0_i32_0 : i32, i32, i32
  }
  func.func @transform_1(%arg0: i32) -> (i32, i32) {
    %c0_i32 = arith.constant 0 : i32
    %c0_i32_0 = arith.constant 0 : i32
    %c0_i32_1 = arith.constant 0 : i32
    return %c0_i32, %c0_i32_0 : i32, i32
  }
  func.func @transform_2(%arg0: i32) -> (i32, i32) {
    %c0_i32 = arith.constant 0 : i32
    %c0_i32_0 = arith.constant 0 : i32
    %c0_i32_1 = arith.constant 0 : i32
    return %c0_i32, %c0_i32_0 : i32, i32
  }
  func.func @transform_3(%arg0: i32) -> (i32, i32) {
    %c0_i32 = arith.constant 0 : i32
    %c0_i32_0 = arith.constant 0 : i32
    %c0_i32_1 = arith.constant 0 : i32
    return %c0_i32, %c0_i32_0 : i32, i32
  }
  func.func @transform_4(%arg0: i32) -> (i32, i32, i32) {
    %c0_i32 = arith.constant 0 : i32
    %c0_i32_0 = arith.constant 0 : i32
    %c0_i32_1 = arith.constant 0 : i32
    return %arg0, %c0_i32, %c0_i32_0 : i32, i32, i32
  }
}

</mosaic_0001>

<llo_original>
// kernel: separable_conv2d.1
$region0: #{separable_conv2d.1}
  #allocation0 [shape = 'u32[]', space=smem, size = 0x4, offset = 0x4, fixed_abs, tag = 'smem constant byte address 0x4 - core index']
  #allocation1 [shape = 'u32[144,128]{1,0:T(1,128)}', space=vmem, size = 0x12000, scoped, tag = 'internal scratch']
  %s0 = inlined_call_operand.vmem [shape: f32[2,32,256], index: 0, kind: input, shape index: {}]
  %s1 = inlined_call_operand.vmem [shape: f32[9,256], index: 1, kind: input, shape index: {}]
  %s2 = inlined_call_operand.vmem [shape: f32[128,288], index: 2, kind: input, shape index: {}]
  %s3 = inlined_call_operand.vmem [shape: f32[128,1], index: 3, kind: input, shape index: {}]
  %s4 = inlined_call_operand.vmem [shape: f32[2,128,256], index: 4, kind: output, shape index: {}]
  %s5 = sld [smem:[#allocation0]]
  $region49: #{separable_conv2d.1} parent=0
    _
  %s7 = ssub.s32 1, %s5
  %s8 = scalar_select 0, %s7, %s5
  loop: start=0, step=1, limit=4
  $region2: #{separable_conv2d.1} parent=0 // loop_pre_header
    _
  $region3: #{separable_conv2d.1} parent=0 // loop_header
    %s10 = sphi 0, %s14
    %p11 = scmp.ge.s32.totalorder %s10, 4
    %s20 = sphi 0, %s22
    %s23 = sphi 0, %s20
    %s24 = sphi 0, %s23
    %s40 = sphi 0, %s24
    %s44 = sphi 0, %s44
    %s46 = sphi 0, %s44
    %s47 = sphi 0, %s46
    %s61 = sphi 0, %s47
    %s65 = sphi 0, %s65
    %s67 = sphi 0, %s65
    %s68 = sphi 0, %s67
    %s82 = sphi 0, %s68
    %s86 = sphi 0, %s86
    %s88 = sphi 0, %s86
    %s89 = sphi 0, %s88
    %s103 = sphi 0, %s89
    %s109 = sphi 0, %s111
    %s112 = sphi 0, %s109
    %s113 = sphi 0, %s112
    %s129 = sphi 0, %s113
  $region4: #{separable_conv2d.1} parent=0 // loop_header_branch
    %13 = sbr.rel (%p11) target = $region8
  $region5: #{separable_conv2d.1} parent=0 // loop_body
    %s15 = ssub.s32 %s10, 1
    %s16 = ssub.s32 %s10, 2
    %s17 = sadd.s32 %s10, 1
    %s18 = ssub.s32 %s10, %s17
    %p19 = scmp.eq.s32.totalorder %s18, 0
    %s21 = sadd.s32 %s20, 1
    %s22 = scalar_select %p19, %s20, %s21
    %p25 = pneg %p19
    %p26 = scmp.eq.s32.totalorder %s10, 1
    %p27 = por %p25, %p26
    %p28 = scmp.ne.s32.totalorder %s20, %s23
    %p29 = scmp.eq.s32.totalorder %s10, 0
    %p30 = por %p28, %p29
    %p31 = scmp.ne.s32.totalorder %s20, %s23
    %p32 = scmp.eq.s32.totalorder %s15, 1
    %p33 = por %p31, %p32
    %p34 = scmp.ne.s32.totalorder %s23, %s24
    %p35 = scmp.eq.s32.totalorder %s15, 0
    %p36 = por %p34, %p35
    %p37 = scmp.ne.s32.totalorder %s23, %s24
    %p38 = scmp.eq.s32.totalorder %s16, 1
    %p39 = por %p37, %p38
    %p41 = scmp.ne.s32.totalorder %s24, %s40
    %p42 = scmp.eq.s32.totalorder %s16, 0
    %p43 = por %p41, %p42
    %s45 = sadd.s32 %s44, 1
    %p48 = scmp.eq.s32.totalorder %s10, 1
    %p49 = scmp.ne.s32.totalorder %s44, %s46
    %p50 = scmp.eq.s32.totalorder %s10, 0
    %p51 = por %p49, %p50
    %p52 = scmp.ne.s32.totalorder %s44, %s46
    %p53 = scmp.eq.s32.totalorder %s15, 1
    %p54 = por %p52, %p53
    %p55 = scmp.ne.s32.totalorder %s46, %s47
    %p56 = scmp.eq.s32.totalorder %s15, 0
    %p57 = por %p55, %p56
    %p58 = scmp.ne.s32.totalorder %s46, %s47
    %p59 = scmp.eq.s32.totalorder %s16, 1
    %p60 = por %p58, %p59
    %p62 = scmp.ne.s32.totalorder %s47, %s61
    %p63 = scmp.eq.s32.totalorder %s16, 0
    %p64 = por %p62, %p63
    %s66 = sadd.s32 %s65, 1
    %p69 = scmp.eq.s32.totalorder %s10, 1
    %p70 = scmp.ne.s32.totalorder %s65, %s67
    %p71 = scmp.eq.s32.totalorder %s10, 0
    %p72 = por %p70, %p71
    %p73 = scmp.ne.s32.totalorder %s65, %s67
    %p74 = scmp.eq.s32.totalorder %s15, 1
    %p75 = por %p73, %p74
    %p76 = scmp.ne.s32.totalorder %s67, %s68
    %p77 = scmp.eq.s32.totalorder %s15, 0
    %p78 = por %p76, %p77
    %p79 = scmp.ne.s32.totalorder %s67, %s68
    %p80 = scmp.eq.s32.totalorder %s16, 1
    %p81 = por %p79, %p80
    %p83 = scmp.ne.s32.totalorder %s68, %s82
    %p84 = scmp.eq.s32.totalorder %s16, 0
    %p85 = por %p83, %p84
    %s87 = sadd.s32 %s86, 1
    %p90 = scmp.eq.s32.totalorder %s10, 1
    %p91 = scmp.ne.s32.totalorder %s86, %s88
    %p92 = scmp.eq.s32.totalorder %s10, 0
    %p93 = por %p91, %p92
    %p94 = scmp.ne.s32.totalorder %s86, %s88
    %p95 = scmp.eq.s32.totalorder %s15, 1
    %p96 = por %p94, %p95
    %p97 = scmp.ne.s32.totalorder %s88, %s89
    %p98 = scmp.eq.s32.totalorder %s15, 0
    %p99 = por %p97, %p98
    %p100 = scmp.ne.s32.totalorder %s88, %s89
    %p101 = scmp.eq.s32.totalorder %s16, 1
    %p102 = por %p100, %p101
    %p104 = scmp.ne.s32.totalorder %s89, %s103
    %p105 = scmp.eq.s32.totalorder %s16, 0
    %p106 = por %p104, %p105
    %s107 = ssub.s32 %s10, %s17
    %p108 = scmp.eq.s32.totalorder %s107, 0
    %s110 = sadd.s32 %s109, 1
    %s111 = scalar_select %p108, %s109, %s110
    %p114 = pneg %p108
    %p115 = scmp.eq.s32.totalorder %s10, 1
    %p116 = por %p114, %p115
    %p117 = scmp.ne.s32.totalorder %s109, %s112
    %p118 = scmp.eq.s32.totalorder %s10, 0
    %p119 = por %p117, %p118
    %p120 = scmp.ne.s32.totalorder %s109, %s112
    %p121 = scmp.eq.s32.totalorder %s15, 1
    %p122 = por %p120, %p121
    %p123 = scmp.ne.s32.totalorder %s112, %s113
    %p124 = scmp.eq.s32.totalorder %s15, 0
    %p125 = por %p123, %p124
    %p126 = scmp.ne.s32.totalorder %s112, %s113
    %p127 = scmp.eq.s32.totalorder %s16, 1
    %p128 = por %p126, %p127
    %p130 = scmp.ne.s32.totalorder %s113, %s129
    %p131 = scmp.eq.s32.totalorder %s16, 0
    %p132 = por %p130, %p131
    %p133 = scmp.le.s32.totalorder 1, %s10
    %p134 = scmp.lt.s32.totalorder %s10, 3
    %p135 = pnand %p133, %p134
    %p136 = pneg %p135
    // Predicated region
    $region9: #{separable_conv2d.1} parent=5 // pred_check
      _
    $region10: #{separable_conv2d.1} parent=5 // pred_check_branch
      %138 = sbr.rel (%p135) target = $region12
    $region11: #{separable_conv2d.1} parent=5 // pred_region
      %s139 = ssub.s32 %s10, 1
      // Predicated region
      $region13: #{separable_conv2d.1} parent=11 // pred_check
        %p140 = pneg %p57
      $region14: #{separable_conv2d.1} parent=11 // pred_check_branch
        %142 = sbr.rel (%p140) target = $region16
      $region15: #{separable_conv2d.1} parent=11 // pred_region
        _
      $region16: #{separable_conv2d.1} parent=11 // pred_fallthru
        _
      // Predicated region
      $region17: #{separable_conv2d.1} parent=11 // pred_check
        %p143 = pneg %p78
      $region18: #{separable_conv2d.1} parent=11 // pred_check_branch
        %145 = sbr.rel (%p143) target = $region20
      $region19: #{separable_conv2d.1} parent=11 // pred_region
        _
      $region20: #{separable_conv2d.1} parent=11 // pred_fallthru
        _
      // Predicated region
      $region21: #{separable_conv2d.1} parent=11 // pred_check
        %p146 = pneg %p99
      $region22: #{separable_conv2d.1} parent=11 // pred_check_branch
        %148 = sbr.rel (%p146) target = $region24
      $region23: #{separable_conv2d.1} parent=11 // pred_region
        _
      $region24: #{separable_conv2d.1} parent=11 // pred_fallthru
        _
    $region12: #{separable_conv2d.1} parent=5 // pred_fallthru
      _
    %p149 = scmp.lt.s32.totalorder %s10, 2
    // Predicated region
    $region25: #{separable_conv2d.1} parent=5 // pred_check
      %p150 = pneg %p149
    $region26: #{separable_conv2d.1} parent=5 // pred_check_branch
      %152 = sbr.rel (%p150) target = $region28
    $region27: #{separable_conv2d.1} parent=5 // pred_region
      // Predicated region
      $region29: #{separable_conv2d.1} parent=27 // pred_check
        %p153 = pneg %p30
      $region30: #{separable_conv2d.1} parent=27 // pred_check_branch
        %155 = sbr.rel (%p153) target = $region32
      $region31: #{separable_conv2d.1} parent=27 // pred_region
        %p156 = scmp.lt.s32.totalorder %s10, 1
        %s157 = scalar_select %p156, %s10, 1
        %s158 = smul.addr %s157, 8
        %s159 = smul.addr %s158, 8
        %s160 = scalar_lea.vmem %s0, %s159
      $region32: #{separable_conv2d.1} parent=27 // pred_fallthru
        _
    $region28: #{separable_conv2d.1} parent=5 // pred_fallthru
      _
    %p161 = scmp.le.s32.totalorder 1, %s10
    %p162 = scmp.lt.s32.totalorder %s10, 3
    %p163 = pnand %p161, %p162
    %p164 = pneg %p163
    // Predicated region
    $region33: #{separable_conv2d.1} parent=5 // pred_check
      _
    $region34: #{separable_conv2d.1} parent=5 // pred_check_branch
      %166 = sbr.rel (%p163) target = $region36
    $region35: #{separable_conv2d.1} parent=5 // pred_region
      %s167 = ssub.s32 %s10, 1
      %p168 = scmp.lt.s32.totalorder %s15, 1
      %s169 = scalar_select %p168, %s15, 1
      %s170 = smul.addr %s169, 8
      %s171 = smul.addr %s170, 8
      %s172 = scalar_lea.vmem %s0, %s171
      %p173 = pneg %p36
      %p174 = pneg %p33
      %p175 = pneg %p57
      %p176 = pneg %p54
      %p177 = pneg %p78
      %p178 = pneg %p75
      %p179 = pneg %p99
      %p180 = pneg %p96
      %p181 = pneg %p125
      %p182 = pneg %p122
      %p183 = scmp.lt.s32.totalorder %s15, 1
      %s184 = scalar_select %p183, %s15, 1
      %s185 = smul.addr %s184, 32
      %s186 = smul.addr %s185, 8
      %s187 = scalar_lea.vmem %s4, %s186
      %p188 = scmp.lt.s32.totalorder %s15, 1
      %s189 = scalar_select %p188, %s15, 1
      %s190 = smul.addr %s189, 8
      %s191 = smul.addr %s190, 8
      %s192 = scalar_lea.vmem %s0, %s191
      %p193 = scmp.lt.s32.totalorder %s15, 1
      %s194 = scalar_select %p193, %s15, 1
      %s195 = smul.addr %s194, 32
      %s196 = smul.addr %s195, 8
      %s197 = scalar_lea.vmem %s4, %s196
      %v198 = vld [vmem:[%s192] sm:$0xff]
      %v199 = vld [vmem:[%s192 + $0x8] sm:$0xff]
      %v200 = vld [vmem:[%s192 + $0x10] sm:$0xff]
      %v201 = vld [vmem:[%s192 + $0x18] sm:$0xff]
      %v202 = vld [vmem:[%s192 + $0x20] sm:$0xff]
      %v203 = vld [vmem:[%s192 + $0x28] sm:$0xff]
      %v204 = vld [vmem:[%s192 + $0x30] sm:$0xff]
      %v205 = vld [vmem:[%s192 + $0x38] sm:$0xff]
      %206 = vrot.lane.b32.xlu0 %v198, 17
      %v207 = vpop.permute.xlu0 %206
      %208 = vrot.lane.b32.xlu0 %v200, 17
      %v209 = vpop.permute.xlu0 %208
      %210 = vrot.lane.b32.xlu0 %v202, 17
      %v211 = vpop.permute.xlu0 %210
      %212 = vrot.lane.b32.xlu0 %v204, 17
      %v213 = vpop.permute.xlu0 %212
      %214 = vrot.lane.b32.xlu0 %v199, 17
      %v215 = vpop.permute.xlu0 %214
      %216 = vrot.lane.b32.xlu0 %v201, 17
      %v217 = vpop.permute.xlu0 %216
      %218 = vrot.lane.b32.xlu0 %v203, 17
      %v219 = vpop.permute.xlu0 %218
      %220 = vrot.lane.b32.xlu0 %v205, 17
      %v221 = vpop.permute.xlu0 %220
      %v222 = vlaneseq
      %v223 = vand.u32 %v222, 127
      %vm224 = vcmp.lt.s32.totalorder %v223, 17
      %v225 = vsel %vm224, %v207, %v215
      %v226 = vsel %vm224, %v209, %v217
      %v227 = vsel %vm224, %v211, %v219
      %v228 = vsel %vm224, %v213, %v221
      %v229 = vsel %vm224, %v215, %v207
      %v230 = vsel %vm224, %v217, %v209
      %v231 = vsel %vm224, %v219, %v211
      %v232 = vsel %vm224, %v221, %v213
      %v233 = vld [vmem:[%s1] ss:$8 sm:$0x3]
      %v235 = vlaneseq
      %v236 = vshrl.u32 %v235, 7
      %v237 = vsub.s32 0, %v236
      %v238 = vrot.slane %v233, %v237
      %v239 = vlaneseq
      %v240 = vshrl.u32 %v239, 7
      %v241 = vsub.s32 1, %v240
      %v242 = vrot.slane %v233, %v241
      %v245 = vmul.f32 %v229, %v238
      %v246 = vmul.f32 %v225, %v242
      %v247 = vmul.f32 %v230, %v238
      %v248 = vmul.f32 %v226, %v242
      %v249 = vmul.f32 %v231, %v238
      %v250 = vmul.f32 %v227, %v242
      %v251 = vmul.f32 %v232, %v238
      %v252 = vmul.f32 %v228, %v242
      %253 = vrot.lane.b32.xlu0 %v198, 16
      %v254 = vpop.permute.xlu0 %253
      %255 = vrot.lane.b32.xlu0 %v200, 16
      %v256 = vpop.permute.xlu0 %255
      %257 = vrot.lane.b32.xlu0 %v202, 16
      %v258 = vpop.permute.xlu0 %257
      %259 = vrot.lane.b32.xlu0 %v204, 16
      %v260 = vpop.permute.xlu0 %259
      %261 = vrot.lane.b32.xlu0 %v199, 16
      %v262 = vpop.permute.xlu0 %261
      %263 = vrot.lane.b32.xlu0 %v201, 16
      %v264 = vpop.permute.xlu0 %263
      %265 = vrot.lane.b32.xlu0 %v203, 16
      %v266 = vpop.permute.xlu0 %265
      %267 = vrot.lane.b32.xlu0 %v205, 16
      %v268 = vpop.permute.xlu0 %267
      %vm269 = vcmp.lt.s32.totalorder %v223, 16
      %v270 = vsel %vm269, %v254, %v262
      %v271 = vsel %vm269, %v256, %v264
      %v272 = vsel %vm269, %v258, %v266
      %v273 = vsel %vm269, %v260, %v268
      %v274 = vsel %vm269, %v262, %v254
      %v275 = vsel %vm269, %v264, %v256
      %v276 = vsel %vm269, %v266, %v258
      %v277 = vsel %vm269, %v268, %v260
      %s278 = scalar_lea.vmem %s1, 1
      %v279 = vld [vmem:[%s278] ss:$8 sm:$0x3]
      %v281 = vlaneseq
      %v282 = vshrl.u32 %v281, 7
      %v283 = vsub.s32 0, %v282
      %v284 = vrot.slane %v279, %v283
      %v285 = vlaneseq
      %v286 = vshrl.u32 %v285, 7
      %v287 = vsub.s32 1, %v286
      %v288 = vrot.slane %v279, %v287
      %v291 = vmul.f32 %v274, %v284
      %v292 = vmul.f32 %v270, %v288
      %v293 = vmul.f32 %v275, %v284
      %v294 = vmul.f32 %v271, %v288
      %v295 = vmul.f32 %v276, %v284
      %v296 = vmul.f32 %v272, %v288
      %v297 = vmul.f32 %v277, %v284
      %v298 = vmul.f32 %v273, %v288
      %299 = vrot.lane.b32.xlu0 %v198, 15
      %v300 = vpop.permute.xlu0 %299
      %301 = vrot.lane.b32.xlu0 %v200, 15
      %v302 = vpop.permute.xlu0 %301
      %303 = vrot.lane.b32.xlu0 %v202, 15
      %v304 = vpop.permute.xlu0 %303
      %305 = vrot.lane.b32.xlu0 %v204, 15
      %v306 = vpop.permute.xlu0 %305
      %307 = vrot.lane.b32.xlu0 %v199, 15
      %v308 = vpop.permute.xlu0 %307
      %309 = vrot.lane.b32.xlu0 %v201, 15
      %v310 = vpop.permute.xlu0 %309
      %311 = vrot.lane.b32.xlu0 %v203, 15
      %v312 = vpop.permute.xlu0 %311
      %313 = vrot.lane.b32.xlu0 %v205, 15
      %v314 = vpop.permute.xlu0 %313
      %vm315 = vcmp.lt.s32.totalorder %v223, 15
      %v316 = vsel %vm315, %v300, %v308
      %v317 = vsel %vm315, %v302, %v310
      %v318 = vsel %vm315, %v304, %v312
      %v319 = vsel %vm315, %v306, %v314
      %v320 = vsel %vm315, %v308, %v300
      %v321 = vsel %vm315, %v310, %v302
      %v322 = vsel %vm315, %v312, %v304
      %v323 = vsel %vm315, %v314, %v306
      %s324 = scalar_lea.vmem %s1, 2
      %v325 = vld [vmem:[%s324] ss:$8 sm:$0x3]
      %v327 = vlaneseq
      %v328 = vshrl.u32 %v327, 7
      %v329 = vsub.s32 0, %v328
      %v330 = vrot.slane %v325, %v329
      %v331 = vlaneseq
      %v332 = vshrl.u32 %v331, 7
      %v333 = vsub.s32 1, %v332
      %v334 = vrot.slane %v325, %v333
      %v337 = vmul.f32 %v320, %v330
      %v338 = vmul.f32 %v316, %v334
      %v339 = vmul.f32 %v321, %v330
      %v340 = vmul.f32 %v317, %v334
      %v341 = vmul.f32 %v322, %v330
      %v342 = vmul.f32 %v318, %v334
      %v343 = vmul.f32 %v323, %v330
      %v344 = vmul.f32 %v319, %v334
      %345 = vrot.lane.b32.xlu0 %v198, 1
      %v346 = vpop.permute.xlu0 %345
      %347 = vrot.lane.b32.xlu0 %v200, 1
      %v348 = vpop.permute.xlu0 %347
      %349 = vrot.lane.b32.xlu0 %v202, 1
      %v350 = vpop.permute.xlu0 %349
      %351 = vrot.lane.b32.xlu0 %v204, 1
      %v352 = vpop.permute.xlu0 %351
      %353 = vrot.lane.b32.xlu0 %v199, 1
      %v354 = vpop.permute.xlu0 %353
      %355 = vrot.lane.b32.xlu0 %v201, 1
      %v356 = vpop.permute.xlu0 %355
      %357 = vrot.lane.b32.xlu0 %v203, 1
      %v358 = vpop.permute.xlu0 %357
      %359 = vrot.lane.b32.xlu0 %v205, 1
      %v360 = vpop.permute.xlu0 %359
      %vm361 = vcmp.lt.s32.totalorder %v223, 1
      %v362 = vsel %vm361, %v346, %v354
      %v363 = vsel %vm361, %v348, %v356
      %v364 = vsel %vm361, %v350, %v358
      %v365 = vsel %vm361, %v352, %v360
      %v366 = vsel %vm361, %v354, %v346
      %v367 = vsel %vm361, %v356, %v348
      %v368 = vsel %vm361, %v358, %v350
      %v369 = vsel %vm361, %v360, %v352
      %s370 = scalar_lea.vmem %s1, 3
      %v371 = vld [vmem:[%s370] ss:$8 sm:$0x3]
      %v373 = vlaneseq
      %v374 = vshrl.u32 %v373, 7
      %v375 = vsub.s32 0, %v374
      %v376 = vrot.slane %v371, %v375
      %v377 = vlaneseq
      %v378 = vshrl.u32 %v377, 7
      %v379 = vsub.s32 1, %v378
      %v380 = vrot.slane %v371, %v379
      %v383 = vmul.f32 %v366, %v376
      %v384 = vmul.f32 %v362, %v380
      %v385 = vmul.f32 %v367, %v376
      %v386 = vmul.f32 %v363, %v380
      %v387 = vmul.f32 %v368, %v376
      %v388 = vmul.f32 %v364, %v380
      %v389 = vmul.f32 %v369, %v376
      %v390 = vmul.f32 %v365, %v380
      %391 = vrot.lane.b32.xlu0 %v198, 127
      %v392 = vpop.permute.xlu0 %391
      %393 = vrot.lane.b32.xlu0 %v200, 127
      %v394 = vpop.permute.xlu0 %393
      %395 = vrot.lane.b32.xlu0 %v202, 127
      %v396 = vpop.permute.xlu0 %395
      %397 = vrot.lane.b32.xlu0 %v204, 127
      %v398 = vpop.permute.xlu0 %397
      %399 = vrot.lane.b32.xlu0 %v199, 127
      %v400 = vpop.permute.xlu0 %399
      %401 = vrot.lane.b32.xlu0 %v201, 127
      %v402 = vpop.permute.xlu0 %401
      %403 = vrot.lane.b32.xlu0 %v203, 127
      %v404 = vpop.permute.xlu0 %403
      %405 = vrot.lane.b32.xlu0 %v205, 127
      %v406 = vpop.permute.xlu0 %405
      %vm407 = vcmp.lt.s32.totalorder %v223, 127
      %v408 = vsel %vm407, %v392, %v400
      %v409 = vsel %vm407, %v394, %v402
      %v410 = vsel %vm407, %v396, %v404
      %v411 = vsel %vm407, %v398, %v406
      %v412 = vsel %vm407, %v400, %v392
      %v413 = vsel %vm407, %v402, %v394
      %v414 = vsel %vm407, %v404, %v396
      %v415 = vsel %vm407, %v406, %v398
      %s416 = scalar_lea.vmem %s1, 5
      %v417 = vld [vmem:[%s416] ss:$8 sm:$0x3]
      %v419 = vlaneseq
      %v420 = vshrl.u32 %v419, 7
      %v421 = vsub.s32 0, %v420
      %v422 = vrot.slane %v417, %v421
      %v423 = vlaneseq
      %v424 = vshrl.u32 %v423, 7
      %v425 = vsub.s32 1, %v424
      %v426 = vrot.slane %v417, %v425
      %v429 = vmul.f32 %v408, %v422
      %v430 = vmul.f32 %v412, %v426
      %v431 = vmul.f32 %v409, %v422
      %v432 = vmul.f32 %v413, %v426
      %v433 = vmul.f32 %v410, %v422
      %v434 = vmul.f32 %v414, %v426
      %v435 = vmul.f32 %v411, %v422
      %v436 = vmul.f32 %v415, %v426
      %437 = vrot.lane.b32.xlu0 %v198, 113
      %v438 = vpop.permute.xlu0 %437
      %439 = vrot.lane.b32.xlu0 %v200, 113
      %v440 = vpop.permute.xlu0 %439
      %441 = vrot.lane.b32.xlu0 %v202, 113
      %v442 = vpop.permute.xlu0 %441
      %443 = vrot.lane.b32.xlu0 %v204, 113
      %v444 = vpop.permute.xlu0 %443
      %445 = vrot.lane.b32.xlu0 %v199, 113
      %v446 = vpop.permute.xlu0 %445
      %447 = vrot.lane.b32.xlu0 %v201, 113
      %v448 = vpop.permute.xlu0 %447
      %449 = vrot.lane.b32.xlu0 %v203, 113
      %v450 = vpop.permute.xlu0 %449
      %451 = vrot.lane.b32.xlu0 %v205, 113
      %v452 = vpop.permute.xlu0 %451
      %vm453 = vcmp.lt.s32.totalorder %v223, 113
      %v454 = vsel %vm453, %v438, %v446
      %v455 = vsel %vm453, %v440, %v448
      %v456 = vsel %vm453, %v442, %v450
      %v457 = vsel %vm453, %v444, %v452
      %v458 = vsel %vm453, %v446, %v438
      %v459 = vsel %vm453, %v448, %v440
      %v460 = vsel %vm453, %v450, %v442
      %v461 = vsel %vm453, %v452, %v444
      %s462 = scalar_lea.vmem %s1, 6
      %v463 = vld [vmem:[%s462] ss:$8 sm:$0x3]
      %v465 = vlaneseq
      %v466 = vshrl.u32 %v465, 7
      %v467 = vsub.s32 0, %v466
      %v468 = vrot.slane %v463, %v467
      %v469 = vlaneseq
      %v470 = vshrl.u32 %v469, 7
      %v471 = vsub.s32 1, %v470
      %v472 = vrot.slane %v463, %v471
      %v475 = vmul.f32 %v454, %v468
      %v476 = vmul.f32 %v458, %v472
      %v477 = vmul.f32 %v455, %v468
      %v478 = vmul.f32 %v459, %v472
      %v479 = vmul.f32 %v456, %v468
      %v480 = vmul.f32 %v460, %v472
      %v481 = vmul.f32 %v457, %v468
      %v482 = vmul.f32 %v461, %v472
      %483 = vrot.lane.b32.xlu0 %v198, 112
      %v484 = vpop.permute.xlu0 %483
      %485 = vrot.lane.b32.xlu0 %v200, 112
      %v486 = vpop.permute.xlu0 %485
      %487 = vrot.lane.b32.xlu0 %v202, 112
      %v488 = vpop.permute.xlu0 %487
      %489 = vrot.lane.b32.xlu0 %v204, 112
      %v490 = vpop.permute.xlu0 %489
      %491 = vrot.lane.b32.xlu0 %v199, 112
      %v492 = vpop.permute.xlu0 %491
      %493 = vrot.lane.b32.xlu0 %v201, 112
      %v494 = vpop.permute.xlu0 %493
      %495 = vrot.lane.b32.xlu0 %v203, 112
      %v496 = vpop.permute.xlu0 %495
      %497 = vrot.lane.b32.xlu0 %v205, 112
      %v498 = vpop.permute.xlu0 %497
      %vm499 = vcmp.lt.s32.totalorder %v223, 112
      %v500 = vsel %vm499, %v484, %v492
      %v501 = vsel %vm499, %v486, %v494
      %v502 = vsel %vm499, %v488, %v496
      %v503 = vsel %vm499, %v490, %v498
      %v504 = vsel %vm499, %v492, %v484
      %v505 = vsel %vm499, %v494, %v486
      %v506 = vsel %vm499, %v496, %v488
      %v507 = vsel %vm499, %v498, %v490
      %s508 = scalar_lea.vmem %s1, 7
      %v509 = vld [vmem:[%s508] ss:$8 sm:$0x3]
      %v511 = vlaneseq
      %v512 = vshrl.u32 %v511, 7
      %v513 = vsub.s32 0, %v512
      %v514 = vrot.slane %v509, %v513
      %v515 = vlaneseq
      %v516 = vshrl.u32 %v515, 7
      %v517 = vsub.s32 1, %v516
      %v518 = vrot.slane %v509, %v517
      %v521 = vmul.f32 %v500, %v514
      %v522 = vmul.f32 %v504, %v518
      %v523 = vmul.f32 %v501, %v514
      %v524 = vmul.f32 %v505, %v518
      %v525 = vmul.f32 %v502, %v514
      %v526 = vmul.f32 %v506, %v518
      %v527 = vmul.f32 %v503, %v514
      %v528 = vmul.f32 %v507, %v518
      %529 = vrot.lane.b32.xlu0 %v198, 111
      %v530 = vpop.permute.xlu0 %529
      %531 = vrot.lane.b32.xlu0 %v200, 111
      %v532 = vpop.permute.xlu0 %531
      %533 = vrot.lane.b32.xlu0 %v202, 111
      %v534 = vpop.permute.xlu0 %533
      %535 = vrot.lane.b32.xlu0 %v204, 111
      %v536 = vpop.permute.xlu0 %535
      %537 = vrot.lane.b32.xlu0 %v199, 111
      %v538 = vpop.permute.xlu0 %537
      %539 = vrot.lane.b32.xlu0 %v201, 111
      %v540 = vpop.permute.xlu0 %539
      %541 = vrot.lane.b32.xlu0 %v203, 111
      %v542 = vpop.permute.xlu0 %541
      %543 = vrot.lane.b32.xlu0 %v205, 111
      %v544 = vpop.permute.xlu0 %543
      %vm545 = vcmp.lt.s32.totalorder %v223, 111
      %v546 = vsel %vm545, %v530, %v538
      %v547 = vsel %vm545, %v532, %v540
      %v548 = vsel %vm545, %v534, %v542
      %v549 = vsel %vm545, %v536, %v544
      %v550 = vsel %vm545, %v538, %v530
      %v551 = vsel %vm545, %v540, %v532
      %v552 = vsel %vm545, %v542, %v534
      %v553 = vsel %vm545, %v544, %v536
      %s554 = scalar_lea.vmem %s1, 16
      %v555 = vld [vmem:[%s554] ss:$8 sm:$0x3]
      %v557 = vlaneseq
      %v558 = vshrl.u32 %v557, 7
      %v559 = vsub.s32 0, %v558
      %v560 = vrot.slane %v555, %v559
      %v561 = vlaneseq
      %v562 = vshrl.u32 %v561, 7
      %v563 = vsub.s32 1, %v562
      %v564 = vrot.slane %v555, %v563
      %v567 = vmul.f32 %v546, %v560
      %v568 = vmul.f32 %v550, %v564
      %v569 = vmul.f32 %v547, %v560
      %v570 = vmul.f32 %v551, %v564
      %v571 = vmul.f32 %v548, %v560
      %v572 = vmul.f32 %v552, %v564
      %v573 = vmul.f32 %v549, %v560
      %v574 = vmul.f32 %v553, %v564
      %v575 = vld [vmem:[%s2] sm:$0xff]
      %v576 = vld [vmem:[%s2 + $0x8] sm:$0xff]
      %v577 = vld [vmem:[%s2 + $0x10] sm:$0xff]
      %v578 = vld [vmem:[%s2 + $0x18] sm:$0xff]
      %v579 = vld [vmem:[%s2 + $0x20] sm:$0xff]
      %v580 = vld [vmem:[%s2 + $0x28] sm:$0xff]
      %v581 = vld [vmem:[%s2 + $0x30] sm:$0xff]
      %v582 = vld [vmem:[%s2 + $0x38] sm:$0xff]
      %v583 = vld [vmem:[%s2 + $0x40] sm:$0xff]
      %v584 = vld [vmem:[%s2 + $0x48] sm:$0xff]
      %v585 = vld [vmem:[%s2 + $0x50] sm:$0xff]
      %v586 = vld [vmem:[%s2 + $0x58] sm:$0xff]
      %v587 = vld [vmem:[%s2 + $0x60] sm:$0xff]
      %v588 = vld [vmem:[%s2 + $0x68] sm:$0xff]
      %v589 = vld [vmem:[%s2 + $0x70] sm:$0xff]
      %v590 = vld [vmem:[%s2 + $0x78] sm:$0xff]
      %v591 = vld [vmem:[%s2 + $0x80] sm:$0xff]
      %v592 = vld [vmem:[%s2 + $0x88] sm:$0xff]
      %v593 = vld [vmem:[%s2 + $0x90] sm:$0xff]
      %v594 = vld [vmem:[%s2 + $0x98] sm:$0xff]
      %v595 = vld [vmem:[%s2 + $0xa0] sm:$0xff]
      %v596 = vld [vmem:[%s2 + $0xa8] sm:$0xff]
      %v597 = vld [vmem:[%s2 + $0xb0] sm:$0xff]
      %v598 = vld [vmem:[%s2 + $0xb8] sm:$0xff]
      %v599 = vld [vmem:[%s2 + $0xc0] sm:$0xff]
      %v600 = vld [vmem:[%s2 + $0xc8] sm:$0xff]
      %v601 = vld [vmem:[%s2 + $0xd0] sm:$0xff]
      %v602 = vld [vmem:[%s2 + $0xd8] sm:$0xff]
      %v603 = vld [vmem:[%s2 + $0xe0] sm:$0xff]
      %v604 = vld [vmem:[%s2 + $0xe8] sm:$0xff]
      %v605 = vld [vmem:[%s2 + $0xf0] sm:$0xff]
      %v606 = vld [vmem:[%s2 + $0xf8] sm:$0xff]
      %v607 = vld [vmem:[%s2 + $0x100] sm:$0xff]
      %v608 = vld [vmem:[%s2 + $0x108] sm:$0xff]
      %v609 = vld [vmem:[%s2 + $0x110] sm:$0xff]
      %v610 = vld [vmem:[%s2 + $0x118] sm:$0xff]
      %v611 = vld [vmem:[%s2 + $0x120] sm:$0xff]
      %v612 = vld [vmem:[%s2 + $0x128] sm:$0xff]
      %v613 = vld [vmem:[%s2 + $0x130] sm:$0xff]
      %v614 = vld [vmem:[%s2 + $0x138] sm:$0xff]
      %v615 = vld [vmem:[%s2 + $0x140] sm:$0xff]
      %v616 = vld [vmem:[%s2 + $0x148] sm:$0xff]
      %v617 = vld [vmem:[%s2 + $0x150] sm:$0xff]
      %v618 = vld [vmem:[%s2 + $0x158] sm:$0xff]
      %v619 = vld [vmem:[%s2 + $0x160] sm:$0xff]
      %v620 = vld [vmem:[%s2 + $0x168] sm:$0xff]
      %v621 = vld [vmem:[%s2 + $0x170] sm:$0xff]
      %v622 = vld [vmem:[%s2 + $0x178] sm:$0xff]
      %v623 = vld [vmem:[%s3] sm:$0xff]
      %v624 = vld [vmem:[%s3 + $0x8] sm:$0xff]
      %v625 = vld [vmem:[%s3 + $0x10] sm:$0xff]
      %v626 = vld [vmem:[%s3 + $0x18] sm:$0xff]
      %v627 = vld [vmem:[%s3 + $0x20] sm:$0xff]
      %v628 = vld [vmem:[%s3 + $0x28] sm:$0xff]
      %v629 = vld [vmem:[%s3 + $0x30] sm:$0xff]
      %v630 = vld [vmem:[%s3 + $0x38] sm:$0xff]
      %v631 = vld [vmem:[%s3 + $0x40] sm:$0xff]
      %v632 = vld [vmem:[%s3 + $0x48] sm:$0xff]
      %v633 = vld [vmem:[%s3 + $0x50] sm:$0xff]
      %v634 = vld [vmem:[%s3 + $0x58] sm:$0xff]
      %v635 = vld [vmem:[%s3 + $0x60] sm:$0xff]
      %v636 = vld [vmem:[%s3 + $0x68] sm:$0xff]
      %v637 = vld [vmem:[%s3 + $0x70] sm:$0xff]
      %v638 = vld [vmem:[%s3 + $0x78] sm:$0xff]
      %640 = vset.pattern.permute.xlu0 0
      %641 = vperm.xlu0 %640, %v623
      %v642 = vpop.permute.xlu0 %641
      %645 = vset.pattern.permute.xlu0 0
      %646 = vperm.xlu0 %645, %v624
      %v647 = vpop.permute.xlu0 %646
      %650 = vset.pattern.permute.xlu0 0
      %651 = vperm.xlu0 %650, %v625
      %v652 = vpop.permute.xlu0 %651
      %655 = vset.pattern.permute.xlu0 0
      %656 = vperm.xlu0 %655, %v626
      %v657 = vpop.permute.xlu0 %656
      %660 = vset.pattern.permute.xlu0 0
      %661 = vperm.xlu0 %660, %v627
      %v662 = vpop.permute.xlu0 %661
      %665 = vset.pattern.permute.xlu0 0
      %666 = vperm.xlu0 %665, %v628
      %v667 = vpop.permute.xlu0 %666
      %670 = vset.pattern.permute.xlu0 0
      %671 = vperm.xlu0 %670, %v629
      %v672 = vpop.permute.xlu0 %671
      %675 = vset.pattern.permute.xlu0 0
      %676 = vperm.xlu0 %675, %v630
      %v677 = vpop.permute.xlu0 %676
      %680 = vset.pattern.permute.xlu0 0
      %681 = vperm.xlu0 %680, %v631
      %v682 = vpop.permute.xlu0 %681
      %685 = vset.pattern.permute.xlu0 0
      %686 = vperm.xlu0 %685, %v632
      %v687 = vpop.permute.xlu0 %686
      %690 = vset.pattern.permute.xlu0 0
      %691 = vperm.xlu0 %690, %v633
      %v692 = vpop.permute.xlu0 %691
      %695 = vset.pattern.permute.xlu0 0
      %696 = vperm.xlu0 %695, %v634
      %v697 = vpop.permute.xlu0 %696
      %700 = vset.pattern.permute.xlu0 0
      %701 = vperm.xlu0 %700, %v635
      %v702 = vpop.permute.xlu0 %701
      %705 = vset.pattern.permute.xlu0 0
      %706 = vperm.xlu0 %705, %v636
      %v707 = vpop.permute.xlu0 %706
      %710 = vset.pattern.permute.xlu0 0
      %711 = vperm.xlu0 %710, %v637
      %v712 = vpop.permute.xlu0 %711
      %715 = vset.pattern.permute.xlu0 0
      %716 = vperm.xlu0 %715, %v638
      %v717 = vpop.permute.xlu0 %716
      %vm719 = vcmask 261120
      %v721 = vsel %vm719, %v577, 0
      %v724 = vsel %vm719, %v580, 0
      %v727 = vsel %vm719, %v583, 0
      %v730 = vsel %vm719, %v586, 0
      %v733 = vsel %vm719, %v589, 0
      %v736 = vsel %vm719, %v592, 0
      %v739 = vsel %vm719, %v595, 0
      %v742 = vsel %vm719, %v598, 0
      %v745 = vsel %vm719, %v601, 0
      %v748 = vsel %vm719, %v604, 0
      %v751 = vsel %vm719, %v607, 0
      %v754 = vsel %vm719, %v610, 0
      %v757 = vsel %vm719, %v613, 0
      %v760 = vsel %vm719, %v616, 0
      %v763 = vsel %vm719, %v619, 0
      %v766 = vsel %vm719, %v622, 0
      %768 = vmatprep.subr.mxu0 %v246
      %769 = vmatpush1.msra.mxu0 %v245
      %770 = vmatprep.subr.mxu0 %v248
      %771 = vmatpush1.msra.mxu0 %v247
      %772 = vmatprep.subr.mxu0 %v250
      %773 = vmatpush1.msra.mxu0 %v249
      %774 = vmatprep.subr.mxu0 %v252
      %775 = vmatpush1.msra.mxu0 %v251
      %776 = vmatprep.subr.mxu0 %v292
      %777 = vmatpush1.msra.mxu0 %v291
      %778 = vmatprep.subr.mxu0 %v294
      %779 = vmatpush1.msra.mxu0 %v293
      %780 = vmatprep.subr.mxu0 %v296
      %781 = vmatpush1.msra.mxu0 %v295
      %782 = vmatprep.subr.mxu0 %v298
      %783 = vmatpush1.msra.mxu0 %v297
      %784 = vmatprep.subr.mxu0 %v338
      %785 = vmatpush1.msra.mxu0 %v337
      %786 = vmatprep.subr.mxu0 %v340
      %787 = vmatpush1.msra.mxu0 %v339
      %788 = vmatprep.subr.mxu0 %v342
      %789 = vmatpush1.msra.mxu0 %v341
      %790 = vmatprep.subr.mxu0 %v344
      %791 = vmatpush1.msra.mxu0 %v343
      %792 = vmatprep.subr.mxu0 %v384
      %793 = vmatpush1.msra.mxu0 %v383
      %794 = vmatprep.subr.mxu0 %v386
      %795 = vmatpush1.msra.mxu0 %v385
      %796 = vmatprep.subr.mxu0 %v388
      %797 = vmatpush1.msra.mxu0 %v387
      %798 = vmatprep.subr.mxu0 %v390
      %799 = vmatpush1.msra.mxu0 %v389
      %800 = vmatprep.subr.mxu0 %v199
      %801 = vmatpush1.msra.mxu0 %v198
      %802 = vmatprep.subr.mxu0 %v201
      %803 = vmatpush1.msra.mxu0 %v200
      %804 = vmatprep.subr.mxu0 %v203
      %805 = vmatpush1.msra.mxu0 %v202
      %806 = vmatprep.subr.mxu0 %v205
      %807 = vmatpush1.msra.mxu0 %v204
      %808 = vmatprep.subr.mxu0 %v430
      %809 = vmatpush1.msra.mxu0 %v429
      %810 = vmatprep.subr.mxu0 %v432
      %811 = vmatpush1.msra.mxu0 %v431
      %812 = vmatprep.subr.mxu0 %v434
      %813 = vmatpush1.msra.mxu0 %v433
      %814 = vmatprep.subr.mxu0 %v436
      %815 = vmatpush1.msra.mxu0 %v435
      %816 = vmatprep.subr.mxu0 %v476
      %817 = vmatpush1.msra.mxu0 %v475
      %818 = vmatprep.subr.mxu0 %v478
      %819 = vmatpush1.msra.mxu0 %v477
      %820 = vmatprep.subr.mxu0 %v480
      %821 = vmatpush1.msra.mxu0 %v479
      %822 = vmatprep.subr.mxu0 %v482
      %823 = vmatpush1.msra.mxu0 %v481
      %824 = vmatprep.subr.mxu0 %v522
      %825 = vmatpush1.msra.mxu0 %v521
      %826 = vmatprep.subr.mxu0 %v524
      %827 = vmatpush1.msra.mxu0 %v523
      %828 = vmatprep.subr.mxu0 %v526
      %829 = vmatpush1.msra.mxu0 %v525
      %830 = vmatprep.subr.mxu0 %v528
      %831 = vmatpush1.msra.mxu0 %v527
      %832 = vmatprep.mubr.f32.mxu0 %v576
      %833 = vmatmul.mubr.f32.gmra.mrb[0].mxu0 %v575
      %v834 = vpop.f32.mrb[0].mxu0
      %v835 = vadd.f32 %v642, %v834
      %v836 = vpop.f32.mrb[0].mxu0
      %v837 = vadd.f32 %v642, %v836
      %838 = vmatprep.mubr.f32.mxu0 %v579
      %839 = vmatmul.mubr.f32.gmra.mrb[0].mxu0 %v578
      %v840 = vpop.f32.mrb[0].mxu0
      %v841 = vadd.f32 %v647, %v840
      %v842 = vpop.f32.mrb[0].mxu0
      %v843 = vadd.f32 %v647, %v842
      %844 = vmatprep.mubr.f32.mxu0 %v582
      %845 = vmatmul.mubr.f32.gmra.mrb[0].mxu0 %v581
      %v846 = vpop.f32.mrb[0].mxu0
      %v847 = vadd.f32 %v652, %v846
      %v848 = vpop.f32.mrb[0].mxu0
      %v849 = vadd.f32 %v652, %v848
      %850 = vmatprep.mubr.f32.mxu0 %v585
      %851 = vmatmul.mubr.f32.gmra.mrb[0].mxu0 %v584
      %v852 = vpop.f32.mrb[0].mxu0
      %v853 = vadd.f32 %v657, %v852
      %v854 = vpop.f32.mrb[0].mxu0
      %v855 = vadd.f32 %v657, %v854
      %856 = vmatprep.mubr.f32.mxu0 %v588
      %857 = vmatmul.mubr.f32.gmra.mrb[0].mxu0 %v587
      %v858 = vpop.f32.mrb[0].mxu0
      %v859 = vadd.f32 %v662, %v858
      %v860 = vpop.f32.mrb[0].mxu0
      %v861 = vadd.f32 %v662, %v860
      %862 = vmatprep.mubr.f32.mxu0 %v591
      %863 = vmatmul.mubr.f32.gmra.mrb[0].mxu0 %v590
      %v864 = vpop.f32.mrb[0].mxu0
      %v865 = vadd.f32 %v667, %v864
      %v866 = vpop.f32.mrb[0].mxu0
      %v867 = vadd.f32 %v667, %v866
      %868 = vmatprep.mubr.f32.mxu0 %v594
      %869 = vmatmul.mubr.f32.gmra.mrb[0].mxu0 %v593
      %v870 = vpop.f32.mrb[0].mxu0
      %v871 = vadd.f32 %v672, %v870
      %v872 = vpop.f32.mrb[0].mxu0
      %v873 = vadd.f32 %v672, %v872
      %874 = vmatprep.mubr.f32.mxu0 %v597
      %875 = vmatmul.mubr.f32.gmra.mrb[0].mxu0 %v596
      %v876 = vpop.f32.mrb[0].mxu0
      %v877 = vadd.f32 %v677, %v876
      %v878 = vpop.f32.mrb[0].mxu0
      %v879 = vadd.f32 %v677, %v878
      %880 = vmatprep.mubr.f32.mxu0 %v600
      %881 = vmatmul.mubr.f32.gmra.mrb[0].mxu0 %v599
      %v882 = vpop.f32.mrb[0].mxu0
      %v883 = vadd.f32 %v682, %v882
      %v884 = vpop.f32.mrb[0].mxu0
      %v885 = vadd.f32 %v682, %v884
      %886 = vmatprep.mubr.f32.mxu0 %v603
      %887 = vmatmul.mubr.f32.gmra.mrb[0].mxu0 %v602
      %v888 = vpop.f32.mrb[0].mxu0
      %v889 = vadd.f32 %v687, %v888
      %v890 = vpop.f32.mrb[0].mxu0
      %v891 = vadd.f32 %v687, %v890
      %892 = vmatprep.mubr.f32.mxu0 %v606
      %893 = vmatmul.mubr.f32.gmra.mrb[0].mxu0 %v605
      %v894 = vpop.f32.mrb[0].mxu0
      %v895 = vadd.f32 %v692, %v894
      %v896 = vpop.f32.mrb[0].mxu0
      %v897 = vadd.f32 %v692, %v896
      %898 = vmatprep.mubr.f32.mxu0 %v609
      %899 = vmatmul.mubr.f32.gmra.mrb[0].mxu0 %v608
      %v900 = vpop.f32.mrb[0].mxu0
      %v901 = vadd.f32 %v697, %v900
      %v902 = vpop.f32.mrb[0].mxu0
      %v903 = vadd.f32 %v697, %v902
      %904 = vmatprep.mubr.f32.mxu0 %v612
      %905 = vmatmul.mubr.f32.gmra.mrb[0].mxu0 %v611
      %v906 = vpop.f32.mrb[0].mxu0
      %v907 = vadd.f32 %v702, %v906
      %v908 = vpop.f32.mrb[0].mxu0
      %v909 = vadd.f32 %v702, %v908
      %910 = vmatprep.mubr.f32.mxu0 %v615
      %911 = vmatmul.mubr.f32.gmra.mrb[0].mxu0 %v614
      %v912 = vpop.f32.mrb[0].mxu0
      %v913 = vadd.f32 %v707, %v912
      %v914 = vpop.f32.mrb[0].mxu0
      %v915 = vadd.f32 %v707, %v914
      %916 = vmatprep.mubr.f32.mxu0 %v618
      %917 = vmatmul.mubr.f32.gmra.mrb[0].mxu0 %v617
      %v918 = vpop.f32.mrb[0].mxu0
      %v919 = vadd.f32 %v712, %v918
      %v920 = vpop.f32.mrb[0].mxu0
      %v921 = vadd.f32 %v712, %v920
      %922 = vmatprep.mubr.f32.mxu0 %v621
      %923 = vmatmul.mubr.f32.gmra.mrb[0].mxu0 %v620
      %v924 = vpop.f32.mrb[0].mxu0
      %v925 = vadd.f32 %v717, %v924
      %v926 = vpop.f32.mrb[0].mxu0
      %v927 = vadd.f32 %v717, %v926
      %928 = vdwg.mxu0
      %929 = vmatprep.subr.mxu0 %v568
      %930 = vmatpush1.msra.mxu0 %v567
      %931 = vmatprep.subr.mxu0 %v570
      %932 = vmatpush1.msra.mxu0 %v569
      %933 = vmatprep.subr.mxu0 %v572
      %934 = vmatpush1.msra.mxu0 %v571
      %935 = vmatprep.subr.mxu0 %v574
      %936 = vmatpush1.msra.mxu0 %v573
      %937 = vmatprep.subr.mxu0 0.0
      %938 = vmatpush1.msra.mxu0 0.0
      %939 = vmatprep.subr.mxu0 0.0
      %940 = vmatpush1.msra.mxu0 0.0
      %941 = vmatprep.subr.mxu0 0.0
      %942 = vmatpush1.msra.mxu0 0.0
      %943 = vmatprep.subr.mxu0 0.0
      %944 = vmatpush1.msra.mxu0 0.0
      %945 = vmatprep.subr.mxu0 0.0
      %946 = vmatpush1.msra.mxu0 0.0
      %947 = vmatprep.subr.mxu0 0.0
      %948 = vmatpush1.msra.mxu0 0.0
      %949 = vmatprep.subr.mxu0 0.0
      %950 = vmatpush1.msra.mxu0 0.0
      %951 = vmatprep.subr.mxu0 0.0
      %952 = vmatpush1.msra.mxu0 0.0
      %953 = vmatprep.subr.mxu0 0.0
      %954 = vmatpush1.msra.mxu0 0.0
      %955 = vmatprep.subr.mxu0 0.0
      %956 = vmatpush1.msra.mxu0 0.0
      %957 = vmatprep.subr.mxu0 0.0
      %958 = vmatpush1.msra.mxu0 0.0
      %959 = vmatprep.subr.mxu0 0.0
      %960 = vmatpush1.msra.mxu0 0.0
      %961 = vmatprep.subr.mxu0 0.0
      %962 = vmatpush1.msra.mxu0 0.0
      %963 = vmatprep.subr.mxu0 0.0
      %964 = vmatpush1.msra.mxu0 0.0
      %965 = vmatprep.subr.mxu0 0.0
      %966 = vmatpush1.msra.mxu0 0.0
      %967 = vmatprep.subr.mxu0 0.0
      %968 = vmatpush1.msra.mxu0 0.0
      %969 = vmatprep.subr.mxu0 0.0
      %970 = vmatpush1.msra.mxu0 0.0
      %971 = vmatprep.subr.mxu0 0.0
      %972 = vmatpush1.msra.mxu0 0.0
      %973 = vmatprep.subr.mxu0 0.0
      %974 = vmatpush1.msra.mxu0 0.0
      %975 = vmatprep.subr.mxu0 0.0
      %976 = vmatpush1.msra.mxu0 0.0
      %977 = vmatprep.subr.mxu0 0.0
      %978 = vmatpush1.msra.mxu0 0.0
      %979 = vmatprep.subr.mxu0 0.0
      %980 = vmatpush1.msra.mxu0 0.0
      %981 = vmatprep.subr.mxu0 0.0
      %982 = vmatpush1.msra.mxu0 0.0
      %983 = vmatprep.subr.mxu0 0.0
      %984 = vmatpush1.msra.mxu0 0.0
      %985 = vmatprep.subr.mxu0 0.0
      %986 = vmatpush1.msra.mxu0 0.0
      %987 = vmatprep.subr.mxu0 0.0
      %988 = vmatpush1.msra.mxu0 0.0
      %989 = vmatprep.subr.mxu0 0.0
      %990 = vmatpush1.msra.mxu0 0.0
      %991 = vmatprep.subr.mxu0 0.0
      %992 = vmatpush1.msra.mxu0 0.0
      %993 = vmatprep.mubr.f32.mxu0 0.0
      %994 = vmatmul.mubr.f32.gmra.mrb[0].mxu0 %v721
      %v995 = vpop.f32.mrb[0].mxu0
      %v996 = vadd.f32 %v835, %v995
      %v997 = vpop.f32.mrb[0].mxu0
      %v998 = vadd.f32 %v837, %v997
      %999 = vmatprep.mubr.f32.mxu0 0.0
      %1000 = vmatmul.mubr.f32.gmra.mrb[0].mxu0 %v724
      %v1001 = vpop.f32.mrb[0].mxu0
      %v1002 = vadd.f32 %v841, %v1001
      %v1003 = vpop.f32.mrb[0].mxu0
      %v1004 = vadd.f32 %v843, %v1003
      %1005 = vmatprep.mubr.f32.mxu0 0.0
      %1006 = vmatmul.mubr.f32.gmra.mrb[0].mxu0 %v727
      %v1007 = vpop.f32.mrb[0].mxu0
      %v1008 = vadd.f32 %v847, %v1007
      %v1009 = vpop.f32.mrb[0].mxu0
      %v1010 = vadd.f32 %v849, %v1009
      %1011 = vmatprep.mubr.f32.mxu0 0.0
      %1012 = vmatmul.mubr.f32.gmra.mrb[0].mxu0 %v730
      %v1013 = vpop.f32.mrb[0].mxu0
      %v1014 = vadd.f32 %v853, %v1013
      %v1015 = vpop.f32.mrb[0].mxu0
      %v1016 = vadd.f32 %v855, %v1015
      %1017 = vmatprep.mubr.f32.mxu0 0.0
      %1018 = vmatmul.mubr.f32.gmra.mrb[0].mxu0 %v733
      %v1019 = vpop.f32.mrb[0].mxu0
      %v1020 = vadd.f32 %v859, %v1019
      %v1021 = vpop.f32.mrb[0].mxu0
      %v1022 = vadd.f32 %v861, %v1021
      %1023 = vmatprep.mubr.f32.mxu0 0.0
      %1024 = vmatmul.mubr.f32.gmra.mrb[0].mxu0 %v736
      %v1025 = vpop.f32.mrb[0].mxu0
      %v1026 = vadd.f32 %v865, %v1025
      %v1027 = vpop.f32.mrb[0].mxu0
      %v1028 = vadd.f32 %v867, %v1027
      %1029 = vmatprep.mubr.f32.mxu0 0.0
      %1030 = vmatmul.mubr.f32.gmra.mrb[0].mxu0 %v739
      %v1031 = vpop.f32.mrb[0].mxu0
      %v1032 = vadd.f32 %v871, %v1031
      %v1033 = vpop.f32.mrb[0].mxu0
      %v1034 = vadd.f32 %v873, %v1033
      %1035 = vmatprep.mubr.f32.mxu0 0.0
      %1036 = vmatmul.mubr.f32.gmra.mrb[0].mxu0 %v742
      %v1037 = vpop.f32.mrb[0].mxu0
      %v1038 = vadd.f32 %v877, %v1037
      %v1039 = vpop.f32.mrb[0].mxu0
      %v1040 = vadd.f32 %v879, %v1039
      %1041 = vmatprep.mubr.f32.mxu0 0.0
      %1042 = vmatmul.mubr.f32.gmra.mrb[0].mxu0 %v745
      %v1043 = vpop.f32.mrb[0].mxu0
      %v1044 = vadd.f32 %v883, %v1043
      %v1045 = vpop.f32.mrb[0].mxu0
      %v1046 = vadd.f32 %v885, %v1045
      %1047 = vmatprep.mubr.f32.mxu0 0.0
      %1048 = vmatmul.mubr.f32.gmra.mrb[0].mxu0 %v748
      %v1049 = vpop.f32.mrb[0].mxu0
      %v1050 = vadd.f32 %v889, %v1049
      %v1051 = vpop.f32.mrb[0].mxu0
      %v1052 = vadd.f32 %v891, %v1051
      %1053 = vmatprep.mubr.f32.mxu0 0.0
      %1054 = vmatmul.mubr.f32.gmra.mrb[0].mxu0 %v751
      %v1055 = vpop.f32.mrb[0].mxu0
      %v1056 = vadd.f32 %v895, %v1055
      %v1057 = vpop.f32.mrb[0].mxu0
      %v1058 = vadd.f32 %v897, %v1057
      %1059 = vmatprep.mubr.f32.mxu0 0.0
      %1060 = vmatmul.mubr.f32.gmra.mrb[0].mxu0 %v754
      %v1061 = vpop.f32.mrb[0].mxu0
      %v1062 = vadd.f32 %v901, %v1061
      %v1063 = vpop.f32.mrb[0].mxu0
      %v1064 = vadd.f32 %v903, %v1063
      %1065 = vmatprep.mubr.f32.mxu0 0.0
      %1066 = vmatmul.mubr.f32.gmra.mrb[0].mxu0 %v757
      %v1067 = vpop.f32.mrb[0].mxu0
      %v1068 = vadd.f32 %v907, %v1067
      %v1069 = vpop.f32.mrb[0].mxu0
      %v1070 = vadd.f32 %v909, %v1069
      %1071 = vmatprep.mubr.f32.mxu0 0.0
      %1072 = vmatmul.mubr.f32.gmra.mrb[0].mxu0 %v760
      %v1073 = vpop.f32.mrb[0].mxu0
      %v1074 = vadd.f32 %v913, %v1073
      %v1075 = vpop.f32.mrb[0].mxu0
      %v1076 = vadd.f32 %v915, %v1075
      %1077 = vmatprep.mubr.f32.mxu0 0.0
      %1078 = vmatmul.mubr.f32.gmra.mrb[0].mxu0 %v763
      %v1079 = vpop.f32.mrb[0].mxu0
      %v1080 = vadd.f32 %v919, %v1079
      %v1081 = vpop.f32.mrb[0].mxu0
      %v1082 = vadd.f32 %v921, %v1081
      %1083 = vmatprep.mubr.f32.mxu0 0.0
      %1084 = vmatmul.mubr.f32.gmra.mrb[0].mxu0 %v766
      %v1085 = vpop.f32.mrb[0].mxu0
      %v1086 = vadd.f32 %v925, %v1085
      %v1087 = vpop.f32.mrb[0].mxu0
      %v1088 = vadd.f32 %v927, %v1087
      %1089 = vdwg.mxu0
      %1090 = vst [vmem:[%s197] sm:$0xff] %v996
      %1091 = vst [vmem:[%s197 + $0x8] sm:$0xff] %v998
      %1092 = vst [vmem:[%s197 + $0x10] sm:$0xff] %v1002
      %1093 = vst [vmem:[%s197 + $0x18] sm:$0xff] %v1004
      %1094 = vst [vmem:[%s197 + $0x20] sm:$0xff] %v1008
      %1095 = vst [vmem:[%s197 + $0x28] sm:$0xff] %v1010
      %1096 = vst [vmem:[%s197 + $0x30] sm:$0xff] %v1014
      %1097 = vst [vmem:[%s197 + $0x38] sm:$0xff] %v1016
      %1098 = vst [vmem:[%s197 + $0x40] sm:$0xff] %v1020
      %1099 = vst [vmem:[%s197 + $0x48] sm:$0xff] %v1022
      %1100 = vst [vmem:[%s197 + $0x50] sm:$0xff] %v1026
      %1101 = vst [vmem:[%s197 + $0x58] sm:$0xff] %v1028
      %1102 = vst [vmem:[%s197 + $0x60] sm:$0xff] %v1032
      %1103 = vst [vmem:[%s197 + $0x68] sm:$0xff] %v1034
      %1104 = vst [vmem:[%s197 + $0x70] sm:$0xff] %v1038
      %1105 = vst [vmem:[%s197 + $0x78] sm:$0xff] %v1040
      %1106 = vst [vmem:[%s197 + $0x80] sm:$0xff] %v1044
      %1107 = vst [vmem:[%s197 + $0x88] sm:$0xff] %v1046
      %1108 = vst [vmem:[%s197 + $0x90] sm:$0xff] %v1050
      %1109 = vst [vmem:[%s197 + $0x98] sm:$0xff] %v1052
      %1110 = vst [vmem:[%s197 + $0xa0] sm:$0xff] %v1056
      %1111 = vst [vmem:[%s197 + $0xa8] sm:$0xff] %v1058
      %1112 = vst [vmem:[%s197 + $0xb0] sm:$0xff] %v1062
      %1113 = vst [vmem:[%s197 + $0xb8] sm:$0xff] %v1064
      %1114 = vst [vmem:[%s197 + $0xc0] sm:$0xff] %v1068
      %1115 = vst [vmem:[%s197 + $0xc8] sm:$0xff] %v1070
      %1116 = vst [vmem:[%s197 + $0xd0] sm:$0xff] %v1074
      %1117 = vst [vmem:[%s197 + $0xd8] sm:$0xff] %v1076
      %1118 = vst [vmem:[%s197 + $0xe0] sm:$0xff] %v1080
      %1119 = vst [vmem:[%s197 + $0xe8] sm:$0xff] %v1082
      %1120 = vst [vmem:[%s197 + $0xf0] sm:$0xff] %v1086
      %1121 = vst [vmem:[%s197 + $0xf8] sm:$0xff] %v1088
      %p1122 = scmp.lt.s32.totalorder %s15, 1
      %s1123 = scalar_select %p1122, %s15, 1
      %s1124 = smul.addr %s1123, 32
      %s1125 = smul.addr %s1124, 8
      %s1126 = scalar_lea.vmem %s4, %s1125
      // Predicated region
      $region37: #{separable_conv2d.1} parent=35 // pred_check
        %p1127 = pneg %p122
      $region38: #{separable_conv2d.1} parent=35 // pred_check_branch
        %1129 = sbr.rel (%p1127) target = $region40
      $region39: #{separable_conv2d.1} parent=35 // pred_region
        _
      $region40: #{separable_conv2d.1} parent=35 // pred_fallthru
        _
    $region36: #{separable_conv2d.1} parent=5 // pred_fallthru
      _
    %p1130 = scmp.le.s32.totalorder 2, %s10
    // Predicated region
    $region41: #{separable_conv2d.1} parent=5 // pred_check
      %p1131 = pneg %p1130
    $region42: #{separable_conv2d.1} parent=5 // pred_check_branch
      %1133 = sbr.rel (%p1131) target = $region44
    $region43: #{separable_conv2d.1} parent=5 // pred_region
      %s1134 = ssub.s32 %s10, 2
      // Predicated region
      $region45: #{separable_conv2d.1} parent=43 // pred_check
        %p1135 = pneg %p128
      $region46: #{separable_conv2d.1} parent=43 // pred_check_branch
        %1137 = sbr.rel (%p1135) target = $region48
      $region47: #{separable_conv2d.1} parent=43 // pred_region
        %p1138 = scmp.lt.s32.totalorder %s16, 1
        %s1139 = scalar_select %p1138, %s16, 1
        %s1140 = smul.addr %s1139, 32
        %s1141 = smul.addr %s1140, 8
        %s1142 = scalar_lea.vmem %s4, %s1141
      $region48: #{separable_conv2d.1} parent=43 // pred_fallthru
        _
    $region44: #{separable_conv2d.1} parent=5 // pred_fallthru
      _
  $region6: #{separable_conv2d.1} parent=0 // loop_footer
    %s14 = sadd.s32 1, %s10
  $region7: #{separable_conv2d.1} parent=0 // loop_footer_branch
    %9 = sbr.rel target = $region3
  $region8: #{separable_conv2d.1} parent=0 // loop_exit
    _

</llo_original>
